<compile_context>
chip_gen: v6e
topology: v6e:2x2x1
jax: 0.10.0
libtpu: 0.0.40
codegen_flags: <defaults>
</compile_context>

<pallas_src>
import math

import jax
import jax.numpy as jnp
from jax.experimental import pallas as pl
from jax.experimental.pallas import tpu as pltpu


# ----------------------------------------------------------------------------
# Kernels
# ----------------------------------------------------------------------------
def _linear_nokloop_kernel(x_ref, w_ref, b_ref, o_ref):
    """Full-K in VMEM (resident or N-tiled path): one MXU pass, no K loop."""
    acc = jnp.dot(x_ref[...], w_ref[...], preferred_element_type=jnp.float32)
    o_ref[...] = (acc + b_ref[...]).astype(o_ref.dtype)


def _linear_ktiled_inplace_kernel(x_ref, w_ref, b_ref, o_ref):
    """K-tiled path, f32 output: accumulate directly into the k-invariant
    output block (stays VMEM-resident across the k axis); bias folded at k==0."""
    k = pl.program_id(2)

    @pl.when(k == 0)
    def _():
        o_ref[...] = jnp.broadcast_to(b_ref[...], o_ref.shape)

    o_ref[...] += jnp.dot(x_ref[...], w_ref[...],
                          preferred_element_type=jnp.float32)


def _linear_ktiled_scratch_kernel(x_ref, w_ref, b_ref, o_ref, acc_ref):
    """K-tiled path, narrow output dtype: f32 scratch accumulator."""
    k = pl.program_id(2)

    @pl.when(k == 0)
    def _():
        acc_ref[...] = jnp.broadcast_to(b_ref[...], acc_ref.shape).astype(jnp.float32)

    acc_ref[...] += jnp.dot(x_ref[...], w_ref[...],
                            preferred_element_type=jnp.float32)

    @pl.when(k == pl.num_programs(2) - 1)
    def _():
        o_ref[...] = acc_ref[...].astype(o_ref.dtype)


# ----------------------------------------------------------------------------
# Helpers
# ----------------------------------------------------------------------------
def _round_up(a, b):
    return ((a + b - 1) // b) * b


def _cdiv(a, b):
    return -(-a // b)


def _pad2d(a, rows, cols):
    r, c = a.shape
    if r == rows and c == cols:
        return a
    return jnp.pad(a, ((0, rows - r), (0, cols - c)))


def _sublane(dtype):
    # Minimal second-to-last-dim multiple for a block of this dtype.
    return max(8, 32 // jnp.dtype(dtype).itemsize)


def _pick_tm(m, sub):
    """Near-divisor of M (<= 256) to minimise padding; prefer >= 2 grid steps."""
    nsteps = max(1, _cdiv(m, 256))
    tm = _round_up(_cdiv(m, nsteps), sub)
    # v7x has 2 TensorCores: guarantee >= 2 parallel M steps when possible.
    while _round_up(m, tm) // tm < 2 and tm > sub:
        tm = _round_up(tm // 2, sub)
    return tm


def _tpu_vmem_budgets():
    """(resident_gate_budget, vmem_limit_ceiling) derived from the chip."""
    try:
        cap = int(getattr(pltpu.get_tpu_info(), "vmem_capacity_bytes", 0))
    except Exception:
        cap = 0
    if cap <= 0:
        cap = 64 << 20                                   # conservative (v7x per-core)
    ceiling = min(max(cap - (8 << 20), 32 << 20), 100 << 20)  # ~100MiB v5e/v6e, ~56MiB v7x
    budget = min(ceiling - (4 << 20), (cap * 3) // 4)         # ~96MiB / ~48MiB gate
    return budget, ceiling


def _vmem_limit(need_bytes, ceiling):
    want = max(need_bytes + (4 << 20), 32 << 20)
    # Never clamp below the actual requirement (+ headroom).
    return int(max(min(want, ceiling), need_bytes + (2 << 20)))


# ----------------------------------------------------------------------------
# Main wrapper
# ----------------------------------------------------------------------------
def pallas_linear_padded(x2d, w_pad, b_pad, n_out, *, compute_dtype=jnp.bfloat16,
                         out_dtype=None, tm=None, tn=None, tk=None, path=None):
    """y[:, :n_out] = x2d @ w_pad[:, :n_out] + b_pad[:, :n_out].

    w_pad: (K, Np) pre-transposed weight in compute_dtype, Np multiple of 128.
    b_pad: (1, Np) f32 bias (zero-padded).
    path:  None (auto) | "resident" | "n_tiled" | "k_tiled" (testing / override).
    """
    M, K = x2d.shape
    Kw, Np = w_pad.shape
    assert Kw == K and Np % 128 == 0

    out_dtype = compute_dtype if out_dtype is None else out_dtype
    cb = jnp.dtype(compute_dtype).itemsize
    ob = jnp.dtype(out_dtype).itemsize
    sub = max(_sublane(compute_dtype), _sublane(out_dtype))

    budget, ceiling = _tpu_vmem_budgets()

    tm = _round_up(tm, sub) if tm else _pick_tm(M, sub)
    Mp = _round_up(M, tm)

    xp = _pad2d(x2d.astype(compute_dtype), Mp, K)
    wc = w_pad.astype(compute_dtype)     # no-op when cached in compute_dtype
    bp = b_pad                           # (1, Np) f32

    flops = 2 * M * K * n_out

    def _finish(out):
        return out if (Mp == M and Np == n_out) else out[:M, :n_out]

    # ---- fast path: whole (K, Np) weight resident in VMEM, 1-D grid over M ----
    # NOTE: the grid-invariant weight/bias are conservatively counted as
    # double-buffered.  TODO(synk): single-buffer them with
    # pl.BlockSpec(..., pipeline_mode=pl.Buffered(1)) once verified on the
    # target jax build; that roughly doubles the K*N range that fits v7x VMEM.
    resident_need = (2 * tm * K * cb + 2 * K * Np * cb
                     + 2 * tm * Np * ob + 2 * Np * 4)
    if path == "resident" or (path is None and resident_need <= budget):
        out = pl.pallas_call(
            _linear_nokloop_kernel,
            out_shape=jax.ShapeDtypeStruct((Mp, Np), out_dtype),
            grid_spec=pltpu.PrefetchScalarGridSpec(
                num_scalar_prefetch=0,
                grid=(Mp // tm,),
                in_specs=[
                    pl.BlockSpec((tm, K), lambda i: (i, 0)),   # x: streamed once
                    pl.BlockSpec((K, Np), lambda i: (0, 0)),   # W^T: fetched once
                    pl.BlockSpec((1, Np), lambda i: (0, 0)),   # bias: fetched once
                ],
                out_specs=pl.BlockSpec((tm, Np), lambda i: (i, 0)),
            ),
            compiler_params=pltpu.CompilerParams(
                dimension_semantics=("parallel",),
                vmem_limit_bytes=_vmem_limit(resident_need, ceiling),
            ),
            cost_estimate=pl.CostEstimate(
                flops=flops, transcendentals=0,
                bytes_accessed=xp.size * cb + wc.size * cb + bp.size * 4
                               + Mp * Np * ob),
        )(xp, wc, bp)
        return _finish(out)

    # ---- middle path: K-resident, N-tiled, N-axis OUTERMOST -------------------
    # Weight streamed from HBM exactly once; only the small x is re-read Np/tn x.
    divisors = [d * 128 for d in range(Np // 128, 0, -1) if (Np // 128) % d == 0]

    def ntiled_need(t):
        return 2 * tm * K * cb + 2 * K * t * cb + 2 * tm * t * ob + 2 * t * 4

    if tn is not None:
        tn_mid = _round_up(tn, 128)
        assert Np % tn_mid == 0, "forced tn must divide the padded N"
    else:
        tn_mid = next((t for t in divisors if ntiled_need(t) <= budget), None)

    if path == "n_tiled" or (path is None and tn_mid is not None):
        t = tn_mid if tn_mid is not None else 128
        out = pl.pallas_call(
            _linear_nokloop_kernel,
            out_shape=jax.ShapeDtypeStruct((Mp, Np), out_dtype),
            grid_spec=pltpu.PrefetchScalarGridSpec(
                num_scalar_prefetch=0,
                grid=(Np // t, Mp // tm),          # j outermost: W tile reused over i
                in_specs=[
                    pl.BlockSpec((tm, K), lambda j, i: (i, 0)),
                    pl.BlockSpec((K, t), lambda j, i: (0, j)),
                    pl.BlockSpec((1, t), lambda j, i: (0, j)),
                ],
                out_specs=pl.BlockSpec((tm, t), lambda j, i: (i, j)),
            ),
            compiler_params=pltpu.CompilerParams(
                dimension_semantics=("parallel", "parallel"),
                vmem_limit_bytes=_vmem_limit(ntiled_need(t), ceiling),
            ),
            cost_estimate=pl.CostEstimate(
                flops=flops, transcendentals=0,
                bytes_accessed=(Np // t) * xp.size * cb + wc.size * cb
                               + bp.size * 4 + Mp * Np * ob),
        )(xp, wc, bp)
        return _finish(out)

    # ---- fallback: (i, j, k) tiled GEMM with a K loop --------------------------
    tk_c = _round_up(tk, 128) if tk else min(512, _round_up(K, 128))
    tn_c = _round_up(tn, 128) if tn else max(t for t in divisors if t <= 512)
    assert Np % tn_c == 0, "forced tn must divide the padded N"
    Kp = _round_up(K, tk_c)

    xk = _pad2d(xp, Mp, Kp)
    wk = _pad2d(wc, Kp, Np)

    f32_out = jnp.dtype(out_dtype) == jnp.float32
    kernel = _linear_ktiled_inplace_kernel if f32_out else _linear_ktiled_scratch_kernel
    scratch = [] if f32_out else [pltpu.VMEM((tm, tn_c), jnp.float32)]
    ktiled_need = (2 * tm * tk_c * cb + 2 * tk_c * tn_c * cb
                   + 2 * tm * tn_c * ob + 2 * tn_c * 4
                   + (0 if f32_out else tm * tn_c * 4))

    out = pl.pallas_call(
        kernel,
        out_shape=jax.ShapeDtypeStruct((Mp, Np), out_dtype),
        grid_spec=pltpu.PrefetchScalarGridSpec(
            num_scalar_prefetch=0,
            grid=(Mp // tm, Np // tn_c, Kp // tk_c),
            in_specs=[
                pl.BlockSpec((tm, tk_c), lambda i, j, k: (i, k)),
                pl.BlockSpec((tk_c, tn_c), lambda i, j, k: (k, j)),
                pl.BlockSpec((1, tn_c), lambda i, j, k: (0, j)),   # k-invariant
            ],
            out_specs=pl.BlockSpec((tm, tn_c), lambda i, j, k: (i, j)),
            scratch_shapes=scratch,
        ),
        compiler_params=pltpu.CompilerParams(
            dimension_semantics=("parallel", "parallel", "arbitrary"),
            vmem_limit_bytes=_vmem_limit(ktiled_need, ceiling),
        ),
        cost_estimate=pl.CostEstimate(
            flops=flops, transcendentals=0,
            bytes_accessed=(Np // tn_c) * xk.size * cb
                           + (Mp // tm) * wk.size * cb
                           + bp.size * 4 + Mp * Np * ob),
    )(xk, wk, bp)
    return _finish(out)


def pallas_linear(x2d, w_t, bias, *, compute_dtype=jnp.bfloat16, out_dtype=None, **kw):
    """y = x2d @ w_t + bias with w_t pre-transposed to (K, N).

    Convenience wrapper that pads/casts per call; prefer FeatureAligner, which
    caches the padded, compute-dtype weight once.
    """
    k_in, n_out = w_t.shape
    n_pad = _round_up(n_out, 128)
    w_pad = _pad2d(jnp.asarray(w_t).astype(compute_dtype), k_in, n_pad)
    b_pad = _pad2d(jnp.asarray(bias).reshape(1, n_out).astype(jnp.float32), 1, n_pad)
    return pallas_linear_padded(x2d, w_pad, b_pad, n_out,
                                compute_dtype=compute_dtype, out_dtype=out_dtype, **kw)


# ----------------------------------------------------------------------------
# Module
# ----------------------------------------------------------------------------
class FeatureAligner:
    """JAX/Pallas equivalent of the PyTorch FeatureAligner (a single nn.Linear).

    The (token_dim, image_feature_dim) weight is transposed, cast to the compute
    dtype and zero-padded to a lane-aligned (K, Np) layout ONCE at construction;
    the bias is padded to (1, Np) f32.  The forward pass is a single pallas_call
    (plus, at most, a small pad of x).
    """
    # TODO(synk): `.to(self.device)` placement is handled by JAX device placement
    # outside the kernel, not inside it.

    def __init__(self, weight, bias, *, compute_dtype=jnp.bfloat16, out_dtype=None):
        w = jnp.asarray(weight)                       # (N, K) -- torch nn.Linear layout
        n_out, k_in = w.shape
        self.n_out = n_out
        self.k_in = k_in
        self.compute_dtype = compute_dtype
        self.out_dtype = compute_dtype if out_dtype is None else out_dtype
        n_pad = _round_up(n_out, 128)
        self.w_pad = _pad2d(w.T.astype(compute_dtype), k_in, n_pad)          # (K, Np)
        self.b_pad = _pad2d(jnp.asarray(bias).reshape(1, n_out).astype(jnp.float32),
                            1, n_pad)                                        # (1, Np)

    def __call__(self, image_features):
        *lead, k = image_features.shape
        assert k == self.k_in
        m = math.prod(lead) if lead else 1
        x2d = image_features.reshape(m, k)
        y2d = pallas_linear_padded(x2d, self.w_pad, self.b_pad, self.n_out,
                                   compute_dtype=self.compute_dtype,
                                   out_dtype=self.out_dtype)
        return y2d.reshape(*lead, self.n_out)


# ----------------------------------------------------------------------------
# Self-test
# ----------------------------------------------------------------------------
if __name__ == "__main__":
    key = jax.random.PRNGKey(0)

    # Small shapes: batch=2, seq=7, image_feature_dim=96, token_dim=200.
    batch, seq, K, N = 2, 7, 96, 200
    k1, k2, k3, key = jax.random.split(key, 4)
    x = jax.random.normal(k1, (batch, seq, K), dtype=jnp.float32)
    bound = 1.0 / (K ** 0.5)
    w = jax.random.uniform(k2, (N, K), jnp.float32, -bound, bound)   # torch (out, in)
    b = jax.random.uniform(k3, (N,), jnp.float32, -bound, bound)
    y_ref = x @ w.T + b

    # Test 1: f32 exact-parity (resident path, non-aligned M and N).
    al_f32 = FeatureAligner(w, b, compute_dtype=jnp.float32, out_dtype=jnp.float32)
    y = jax.block_until_ready(al_f32(x))
    assert y.shape == (batch, seq, N) and y.dtype == jnp.float32
    assert jnp.allclose(y, y_ref, atol=2e-5, rtol=2e-5)

    # Test 2: default bf16 MXU inputs + bf16 output, f32 accumulation.
    al_bf16 = FeatureAligner(w, b)
    y16 = jax.block_until_ready(al_bf16(x))
    assert y16.shape == (batch, seq, N) and y16.dtype == jnp.bfloat16
    assert jnp.allclose(y16.astype(jnp.float32), y_ref, atol=6e-2, rtol=6e-2)

    # Test 3: forced middle path (K-resident, N-tiled, weight streamed once).
    x2d = x.reshape(-1, K)
    y_mid = pallas_linear(x2d, w.T, b, compute_dtype=jnp.float32,
                          out_dtype=jnp.float32, path="n_tiled", tn=128)
    y_mid = jax.block_until_ready(y_mid)
    assert jnp.allclose(y_mid, y_ref.reshape(-1, N), atol=2e-5, rtol=2e-5)

    # Test 4: forced K-tiled fallback, f32 output (in-place o_ref accumulation).
    batch2, seq2, K2, N2 = 2, 8, 256, 384
    k1, k2, k3, key = jax.random.split(key, 4)
    x2 = jax.random.normal(k1, (batch2 * seq2, K2), dtype=jnp.float32)
    bound2 = 1.0 / (K2 ** 0.5)
    w2 = jax.random.uniform(k2, (N2, K2), jnp.float32, -bound2, bound2)
    b2 = jax.random.uniform(k3, (N2,), jnp.float32, -bound2, bound2)
    y2_ref = x2 @ w2.T + b2
    y2 = pallas_linear(x2, w2.T, b2, compute_dtype=jnp.float32, out_dtype=jnp.float32,
                       path="k_tiled", tm=8, tn=128, tk=128)
    y2 = jax.block_until_ready(y2)
    assert jnp.allclose(y2, y2_ref, atol=2e-5, rtol=2e-5)

    # Test 5: forced K-tiled fallback, bf16 output (f32 scratch accumulator).
    y3 = pallas_linear(x2, w2.T, b2, compute_dtype=jnp.float32, out_dtype=jnp.bfloat16,
                       path="k_tiled", tm=16, tn=128, tk=128)
    y3 = jax.block_until_ready(y3)
    assert jnp.allclose(y3.astype(jnp.float32), y2_ref, atol=3e-2, rtol=3e-2)

    print("KERNEL_OK")
</pallas_src>

<mosaic_0001>
module attributes {stable_mosaic.version = 11 : i64} {
  func.func @_linear_nokloop_kernel(%arg0: i32, %arg1: memref<8x96xf32, #tpu.memory_space<vmem>>, %arg2: memref<96x256xf32, #tpu.memory_space<vmem>>, %arg3: memref<1x256xf32, #tpu.memory_space<vmem>>, %arg4: memref<8x256xf32, #tpu.memory_space<vmem>>) attributes {dimension_semantics = [#tpu.dimension_semantics<parallel>], iteration_bounds = array<i64: 2>, scalar_prefetch = 0 : i64, scratch_operands = 0 : i64, tpu.core_type = #tpu.core_type<tc>, window_params = [{transform_indices = @transform_0, window_bounds = array<i64: 8, 96>}, {pipeline_mode = #tpu.pipeline_mode<synchronous>, transform_indices = @transform_1, window_bounds = array<i64: 96, 256>}, {pipeline_mode = #tpu.pipeline_mode<synchronous>, transform_indices = @transform_2, window_bounds = array<i64: 1, 256>}, {transform_indices = @transform_3, window_bounds = array<i64: 8, 256>}]} {
    %c0 = arith.constant 0 : index
    %c0_0 = arith.constant 0 : index
    %0 = vector.load %arg1[%c0, %c0_0] : memref<8x96xf32, #tpu.memory_space<vmem>>, vector<8x96xf32>
    %c0_1 = arith.constant 0 : index
    %c0_2 = arith.constant 0 : index
    %1 = vector.load %arg2[%c0_1, %c0_2] : memref<96x256xf32, #tpu.memory_space<vmem>>, vector<96x256xf32>
    %cst = arith.constant dense<0.000000e+00> : vector<8x256xf32>
    %2 = tpu.matmul %0, %1, %cst {dimension_numbers = #tpu.dot_dimension_numbers<[1], [0], [0], [1], [0, 0, 1, 1], [], []>} : vector<8x96xf32>, vector<96x256xf32>, vector<8x256xf32> -> vector<8x256xf32>
    %c0_3 = arith.constant 0 : index
    %c0_4 = arith.constant 0 : index
    %3 = vector.load %arg3[%c0_3, %c0_4] : memref<1x256xf32, #tpu.memory_space<vmem>>, vector<1x256xf32>
    %4 = vector.broadcast %3 : vector<1x256xf32> to vector<8x256xf32>
    %5 = arith.addf %2, %4 : vector<8x256xf32>
    %c0_5 = arith.constant 0 : index
    %c0_6 = arith.constant 0 : index
    %6 = vector.load %arg4[%c0_5, %c0_6] : memref<8x256xf32, #tpu.memory_space<vmem>>, vector<8x256xf32>
    tpu.vector_store %arg4[%c0_5, %c0_6], %5 {strides = array<i32>} : memref<8x256xf32, #tpu.memory_space<vmem>>, vector<8x256xf32>,
    return
  }
  func.func @transform_0(%arg0: i32) -> (i32, i32) {
    %c0_i32 = arith.constant 0 : i32
    %c0_i32_0 = arith.constant 0 : i32
    return %arg0, %c0_i32 : i32, i32
  }
  func.func @transform_1(%arg0: i32) -> (i32, i32) {
    %c0_i32 = arith.constant 0 : i32
    %c0_i32_0 = arith.constant 0 : i32
    %c0_i32_1 = arith.constant 0 : i32
    return %c0_i32, %c0_i32_0 : i32, i32
  }
  func.func @transform_2(%arg0: i32) -> (i32, i32) {
    %c0_i32 = arith.constant 0 : i32
    %c0_i32_0 = arith.constant 0 : i32
    %c0_i32_1 = arith.constant 0 : i32
    return %c0_i32, %c0_i32_0 : i32, i32
  }
  func.func @transform_3(%arg0: i32) -> (i32, i32) {
    %c0_i32 = arith.constant 0 : i32
    %c0_i32_0 = arith.constant 0 : i32
    return %arg0, %c0_i32 : i32, i32
  }
}

</mosaic_0001>

<llo_original>
// kernel: tpu_custom_call.1
$region0: #{tpu_custom_call.1}
  #allocation0 [shape = 'u32[]', space=smem, size = 0x4, offset = 0x4, fixed_abs, tag = 'smem constant byte address 0x4 - core index']
  #allocation1 [shape = 'u32[144,128]{1,0:T(1,128)}', space=vmem, size = 0x12000, scoped, tag = 'internal scratch']
  %s0 = inlined_call_operand.hbm [shape: f32[16,96], index: 0, kind: input, shape index: {}]
  %s1 = inlined_call_operand.hbm [shape: f32[96,256], index: 1, kind: input, shape index: {}]
  %s2 = inlined_call_operand.vmem [shape: f32[1,256], index: 2, kind: input, shape index: {}]
  %s3 = inlined_call_operand.hbm [shape: f32[16,256], index: 3, kind: output, shape index: {}]
  %s4 = sld [smem:[#allocation0]]
  $region53: #{tpu_custom_call.1} parent=0
    _
  %s6 = ssub.s32 1, %s4
  %s7 = scalar_select 0, %s6, %s4
  $region1: #{tpu_custom_call.1} parent=0
    #allocation2 [shape = 'u8[8192]{0}', space=vmem, size = 0x2000, scoped, tag = 'input window, operand 0']
    #allocation3 [shape = 's32[2]{0}', space=sflag, size = 0x8, scoped, tag = 'scoped memory for tpu_custom_call.1']
    #allocation4 [shape = 's32[2]{0}', space=sflag, size = 0x8, scoped, tag = 'scoped memory for tpu_custom_call.1']
    #allocation5 [shape = 'u8[98304]{0}', space=vmem, size = 0x18000, scoped, tag = 'input window, operand 1, single buffered']
    #allocation6 [shape = 's32[1]{0}', space=sflag, size = 0x4, scoped, tag = 'scoped memory for tpu_custom_call.1']
    #allocation7 [shape = 'u8[16384]{0}', space=vmem, size = 0x4000, scoped, tag = 'output window, operand 0']
    %8 = vsyncpa [#allocation3], 0
    %s9 = scalar_lea.sflag [#allocation3], 1
    %10 = vsyncpa %s9, 0
    %11 = vsyncpa [#allocation6], 0
    %12 = vsyncpa [#allocation4], 0
    %s13 = scalar_lea.sflag [#allocation4], 1
    %14 = vsyncpa %s13, 0
    loop: start=0, step=1, limit=4
    $region2: #{tpu_custom_call.1} parent=1 // loop_pre_header
      _
    $region3: #{tpu_custom_call.1} parent=1 // loop_header
      %s16 = sphi 0, %s20
      %p17 = scmp.ge.s32.totalorder %s16, 4
      %s26 = sphi 0, %s28
      %s29 = sphi 0, %s26
      %s30 = sphi 0, %s29
      %s46 = sphi 0, %s30
      %s50 = sphi 0, %s50
      %s52 = sphi 0, %s50
      %s53 = sphi 0, %s52
      %s67 = sphi 0, %s53
      %s71 = sphi 0, %s71
      %s73 = sphi 0, %s71
      %s74 = sphi 0, %s73
      %s88 = sphi 0, %s74
      %s94 = sphi 0, %s96
      %s97 = sphi 0, %s94
      %s98 = sphi 0, %s97
      %s114 = sphi 0, %s98
    $region4: #{tpu_custom_call.1} parent=1 // loop_header_branch
      %19 = sbr.rel (%p17) target = $region8
    $region5: #{tpu_custom_call.1} parent=1 // loop_body
      %s21 = ssub.s32 %s16, 1
      %s22 = ssub.s32 %s16, 2
      %s23 = sadd.s32 %s16, 1
      %s24 = ssub.s32 %s16, %s23
      %p25 = scmp.eq.s32.totalorder %s24, 0
      %s27 = sadd.s32 %s26, 1
      %s28 = scalar_select %p25, %s26, %s27
      %p31 = pneg %p25
      %p32 = scmp.eq.s32.totalorder %s16, 1
      %p33 = por %p31, %p32
      %p34 = scmp.ne.s32.totalorder %s26, %s29
      %p35 = scmp.eq.s32.totalorder %s16, 0
      %p36 = por %p34, %p35
      %p37 = scmp.ne.s32.totalorder %s26, %s29
      %p38 = scmp.eq.s32.totalorder %s21, 1
      %p39 = por %p37, %p38
      %p40 = scmp.ne.s32.totalorder %s29, %s30
      %p41 = scmp.eq.s32.totalorder %s21, 0
      %p42 = por %p40, %p41
      %p43 = scmp.ne.s32.totalorder %s29, %s30
      %p44 = scmp.eq.s32.totalorder %s22, 1
      %p45 = por %p43, %p44
      %p47 = scmp.ne.s32.totalorder %s30, %s46
      %p48 = scmp.eq.s32.totalorder %s22, 0
      %p49 = por %p47, %p48
      %s51 = sadd.s32 %s50, 1
      %p54 = scmp.eq.s32.totalorder %s16, 1
      %p55 = scmp.ne.s32.totalorder %s50, %s52
      %p56 = scmp.eq.s32.totalorder %s16, 0
      %p57 = por %p55, %p56
      %p58 = scmp.ne.s32.totalorder %s50, %s52
      %p59 = scmp.eq.s32.totalorder %s21, 1
      %p60 = por %p58, %p59
      %p61 = scmp.ne.s32.totalorder %s52, %s53
      %p62 = scmp.eq.s32.totalorder %s21, 0
      %p63 = por %p61, %p62
      %p64 = scmp.ne.s32.totalorder %s52, %s53
      %p65 = scmp.eq.s32.totalorder %s22, 1
      %p66 = por %p64, %p65
      %p68 = scmp.ne.s32.totalorder %s53, %s67
      %p69 = scmp.eq.s32.totalorder %s22, 0
      %p70 = por %p68, %p69
      %s72 = sadd.s32 %s71, 1
      %p75 = scmp.eq.s32.totalorder %s16, 1
      %p76 = scmp.ne.s32.totalorder %s71, %s73
      %p77 = scmp.eq.s32.totalorder %s16, 0
      %p78 = por %p76, %p77
      %p79 = scmp.ne.s32.totalorder %s71, %s73
      %p80 = scmp.eq.s32.totalorder %s21, 1
      %p81 = por %p79, %p80
      %p82 = scmp.ne.s32.totalorder %s73, %s74
      %p83 = scmp.eq.s32.totalorder %s21, 0
      %p84 = por %p82, %p83
      %p85 = scmp.ne.s32.totalorder %s73, %s74
      %p86 = scmp.eq.s32.totalorder %s22, 1
      %p87 = por %p85, %p86
      %p89 = scmp.ne.s32.totalorder %s74, %s88
      %p90 = scmp.eq.s32.totalorder %s22, 0
      %p91 = por %p89, %p90
      %s92 = ssub.s32 %s16, %s23
      %p93 = scmp.eq.s32.totalorder %s92, 0
      %s95 = sadd.s32 %s94, 1
      %s96 = scalar_select %p93, %s94, %s95
      %p99 = pneg %p93
      %p100 = scmp.eq.s32.totalorder %s16, 1
      %p101 = por %p99, %p100
      %p102 = scmp.ne.s32.totalorder %s94, %s97
      %p103 = scmp.eq.s32.totalorder %s16, 0
      %p104 = por %p102, %p103
      %p105 = scmp.ne.s32.totalorder %s94, %s97
      %p106 = scmp.eq.s32.totalorder %s21, 1
      %p107 = por %p105, %p106
      %p108 = scmp.ne.s32.totalorder %s97, %s98
      %p109 = scmp.eq.s32.totalorder %s21, 0
      %p110 = por %p108, %p109
      %p111 = scmp.ne.s32.totalorder %s97, %s98
      %p112 = scmp.eq.s32.totalorder %s22, 1
      %p113 = por %p111, %p112
      %p115 = scmp.ne.s32.totalorder %s98, %s114
      %p116 = scmp.eq.s32.totalorder %s22, 0
      %p117 = por %p115, %p116
      %p118 = scmp.le.s32.totalorder 1, %s16
      %p119 = scmp.lt.s32.totalorder %s16, 3
      %p120 = pnand %p118, %p119
      %p121 = pneg %p120
      // Predicated region
      $region9: #{tpu_custom_call.1} parent=5 // pred_check
        _
      $region10: #{tpu_custom_call.1} parent=5 // pred_check_branch
        %123 = sbr.rel (%p120) target = $region12
      $region11: #{tpu_custom_call.1} parent=5 // pred_region
        %s124 = ssub.s32 %s16, 1
        // Predicated region
        $region13: #{tpu_custom_call.1} parent=11 // pred_check
          %p125 = pneg %p63
        $region14: #{tpu_custom_call.1} parent=11 // pred_check_branch
          %127 = sbr.rel (%p125) target = $region16
        $region15: #{tpu_custom_call.1} parent=11 // pred_region
          %s129 = ssub.s32 3072, 3072
          %130 = vsyncadd [#allocation6], %s129
          %s131 = sshll.u32 [#allocation5], 4
          %s132 = int_to_ptr.vmem [resolvable:$true] %s131
          %137 = dma.hbm_to_vmem [thread:$0]  %s1, 3072, %s132, [#allocation6], 256, 256, 16
        $region16: #{tpu_custom_call.1} parent=11 // pred_fallthru
          _
        // Predicated region
        $region17: #{tpu_custom_call.1} parent=11 // pred_check
          %p138 = pneg %p84
        $region18: #{tpu_custom_call.1} parent=11 // pred_check_branch
          %140 = sbr.rel (%p138) target = $region20
        $region19: #{tpu_custom_call.1} parent=11 // pred_region
          _
        $region20: #{tpu_custom_call.1} parent=11 // pred_fallthru
          _
      $region12: #{tpu_custom_call.1} parent=5 // pred_fallthru
        _
      %p141 = scmp.lt.s32.totalorder %s16, 2
      // Predicated region
      $region21: #{tpu_custom_call.1} parent=5 // pred_check
        %p142 = pneg %p141
      $region22: #{tpu_custom_call.1} parent=5 // pred_check_branch
        %144 = sbr.rel (%p142) target = $region24
      $region23: #{tpu_custom_call.1} parent=5 // pred_region
        // Predicated region
        $region25: #{tpu_custom_call.1} parent=23 // pred_check
          %p145 = pneg %p36
        $region26: #{tpu_custom_call.1} parent=23 // pred_check_branch
          %147 = sbr.rel (%p145) target = $region28
        $region27: #{tpu_custom_call.1} parent=23 // pred_region
          %s148 = sand.u32 %s26, 1
          %s149 = scalar_lea.sflag [#allocation3], %s148
          %s150 = sand.u32 %s26, 1
          %s151 = smul.addr %s150, 8
          %s152 = scalar_lea.vmem [#allocation2], %s151
          %s154 = ssub.s32 128, 128
          %155 = vsyncadd %s149, %s154
          %s156 = smul.addr %s16, 128
          %s157 = scalar_lea.hbm %s0, %s156
          %s159 = sshll.u32 %s152, 4
          %s160 = int_to_ptr.vmem [resolvable:$true] %s159
          %162 = dma.hbm_to_vmem [thread:$0]  %s157, 128, %s160, %s149
        $region28: #{tpu_custom_call.1} parent=23 // pred_fallthru
          _
      $region24: #{tpu_custom_call.1} parent=5 // pred_fallthru
        _
      %p163 = scmp.le.s32.totalorder 1, %s16
      %p164 = scmp.lt.s32.totalorder %s16, 3
      %p165 = pnand %p163, %p164
      %p166 = pneg %p165
      // Predicated region
      $region29: #{tpu_custom_call.1} parent=5 // pred_check
        _
      $region30: #{tpu_custom_call.1} parent=5 // pred_check_branch
        %168 = sbr.rel (%p165) target = $region32
      $region31: #{tpu_custom_call.1} parent=5 // pred_region
        %s169 = ssub.s32 %s16, 1
        %s170 = sand.u32 %s29, 1
        %s171 = scalar_lea.sflag [#allocation3], %s170
        %s172 = sand.u32 %s29, 1
        %s173 = smul.addr %s172, 8
        %s174 = scalar_lea.vmem [#allocation2], %s173
        // Predicated region
        $region33: #{tpu_custom_call.1} parent=31 // pred_check
          %p175 = pneg %p42
        $region34: #{tpu_custom_call.1} parent=31 // pred_check_branch
          %177 = sbr.rel (%p175) target = $region36
        $region35: #{tpu_custom_call.1} parent=31 // pred_region
          %178 = dma.done %s171, 128
        $region36: #{tpu_custom_call.1} parent=31 // pred_fallthru
          _
        // Predicated region
        $region37: #{tpu_custom_call.1} parent=31 // pred_check
          %p179 = pneg %p63
        $region38: #{tpu_custom_call.1} parent=31 // pred_check_branch
          %181 = sbr.rel (%p179) target = $region40
        $region39: #{tpu_custom_call.1} parent=31 // pred_region
          %182 = dma.done [#allocation6], 3072
        $region40: #{tpu_custom_call.1} parent=31 // pred_fallthru
          _
        %s183 = sand.u32 %s29, 1
        %s184 = scalar_lea.sflag [#allocation3], %s183
        %s185 = sand.u32 %s29, 1
        %s186 = smul.addr %s185, 8
        %s187 = scalar_lea.vmem [#allocation2], %s186
        %p188 = pneg %p42
        %p189 = pneg %p39
        %p190 = pneg %p63
        %p191 = pneg %p60
        %p192 = pneg %p84
        %p193 = pneg %p81
        %p194 = pneg %p110
        %p195 = pneg %p107
        %s196 = sand.u32 %s97, 1
        %s197 = scalar_lea.sflag [#allocation4], %s196
        %s198 = sand.u32 %s97, 1
        %s199 = smul.addr %s198, 16
        %s200 = scalar_lea.vmem [#allocation7], %s199
        %v201 = vld [vmem:[%s174] sm:$0xff]
        %v202 = vld [vmem:[#allocation5] sm:$0xff]
        %v203 = vld [vmem:[#allocation5 + $0x8] sm:$0xff]
        %v204 = vld [vmem:[#allocation5 + $0x10] sm:$0xff]
        %v205 = vld [vmem:[#allocation5 + $0x18] sm:$0xff]
        %v206 = vld [vmem:[#allocation5 + $0x20] sm:$0xff]
        %v207 = vld [vmem:[#allocation5 + $0x28] sm:$0xff]
        %v208 = vld [vmem:[#allocation5 + $0x30] sm:$0xff]
        %v209 = vld [vmem:[#allocation5 + $0x38] sm:$0xff]
        %v210 = vld [vmem:[#allocation5 + $0x40] sm:$0xff]
        %v211 = vld [vmem:[#allocation5 + $0x48] sm:$0xff]
        %v212 = vld [vmem:[#allocation5 + $0x50] sm:$0xff]
        %v213 = vld [vmem:[#allocation5 + $0x58] sm:$0xff]
        %v214 = vld [vmem:[#allocation5 + $0x60] sm:$0xff]
        %v215 = vld [vmem:[#allocation5 + $0x68] sm:$0xff]
        %v216 = vld [vmem:[#allocation5 + $0x70] sm:$0xff]
        %v217 = vld [vmem:[#allocation5 + $0x78] sm:$0xff]
        %v218 = vld [vmem:[#allocation5 + $0x80] sm:$0xff]
        %v219 = vld [vmem:[#allocation5 + $0x88] sm:$0xff]
        %v220 = vld [vmem:[#allocation5 + $0x90] sm:$0xff]
        %v221 = vld [vmem:[#allocation5 + $0x98] sm:$0xff]
        %v222 = vld [vmem:[#allocation5 + $0xa0] sm:$0xff]
        %v223 = vld [vmem:[#allocation5 + $0xa8] sm:$0xff]
        %v224 = vld [vmem:[#allocation5 + $0xb0] sm:$0xff]
        %v225 = vld [vmem:[#allocation5 + $0xb8] sm:$0xff]
        %v226 = vld [vmem:[%s2] sm:$0x3]
        %v228 = vlaneseq
        %v229 = vshrl.u32 %v228, 7
        %v230 = vsub.s32 0, %v229
        %v231 = vrot.slane %v226, %v230
        %v232 = vlaneseq
        %v233 = vshrl.u32 %v232, 7
        %v234 = vsub.s32 1, %v233
        %v235 = vrot.slane %v226, %v234
        %vm238 = vcmask 785408
        %v240 = vsel %vm238, %v201, 0
        %242 = vmatprep.subr.mxu0 0.0
        %243 = vmatpush1.msra.mxu0 0.0
        %244 = vmatprep.subr.mxu0 0.0
        %245 = vmatpush1.msra.mxu0 0.0
        %246 = vmatprep.subr.mxu0 0.0
        %247 = vmatpush1.msra.mxu0 0.0
        %248 = vmatprep.subr.mxu0 0.0
        %249 = vmatpush1.msra.mxu0 0.0
        %250 = vmatprep.subr.mxu0 %v225
        %251 = vmatpush1.msra.mxu0 %v224
        %252 = vmatprep.subr.mxu0 %v223
        %253 = vmatpush1.msra.mxu0 %v222
        %254 = vmatprep.subr.mxu0 %v221
        %255 = vmatpush1.msra.mxu0 %v220
        %256 = vmatprep.subr.mxu0 %v219
        %257 = vmatpush1.msra.mxu0 %v218
        %258 = vmatprep.subr.mxu0 %v217
        %259 = vmatpush1.msra.mxu0 %v216
        %260 = vmatprep.subr.mxu0 %v215
        %261 = vmatpush1.msra.mxu0 %v214
        %262 = vmatprep.subr.mxu0 %v213
        %263 = vmatpush1.msra.mxu0 %v212
        %264 = vmatprep.subr.mxu0 %v211
        %265 = vmatpush1.msra.mxu0 %v210
        %266 = vmatprep.subr.mxu0 %v209
        %267 = vmatpush1.msra.mxu0 %v208
        %268 = vmatprep.subr.mxu0 %v207
        %269 = vmatpush1.msra.mxu0 %v206
        %270 = vmatprep.subr.mxu0 %v205
        %271 = vmatpush1.msra.mxu0 %v204
        %272 = vmatprep.subr.mxu0 %v203
        %273 = vmatpush1.msra.mxu0 %v202
        %274 = vmatprep.subr.mxu0 0.0
        %275 = vmatpush2.msra.mxu0 0.0
        %276 = vmatprep.subr.mxu0 0.0
        %277 = vmatpush2.msra.mxu0 0.0
        %278 = vmatprep.subr.mxu0 0.0
        %279 = vmatpush2.msra.mxu0 0.0
        %280 = vmatprep.subr.mxu0 0.0
        %281 = vmatpush2.msra.mxu0 0.0
        %282 = vmatprep.subr.mxu0 0.0
        %283 = vmatpush2.msra.mxu0 0.0
        %284 = vmatprep.subr.mxu0 0.0
        %285 = vmatpush2.msra.mxu0 0.0
        %286 = vmatprep.subr.mxu0 0.0
        %287 = vmatpush2.msra.mxu0 0.0
        %288 = vmatprep.subr.mxu0 0.0
        %289 = vmatpush2.msra.mxu0 0.0
        %290 = vmatprep.subr.mxu0 0.0
        %291 = vmatpush2.msra.mxu0 0.0
        %292 = vmatprep.subr.mxu0 0.0
        %293 = vmatpush2.msra.mxu0 0.0
        %294 = vmatprep.subr.mxu0 0.0
        %295 = vmatpush2.msra.mxu0 0.0
        %296 = vmatprep.subr.mxu0 0.0
        %297 = vmatpush2.msra.mxu0 0.0
        %298 = vmatprep.subr.mxu0 0.0
        %299 = vmatpush2.msra.mxu0 0.0
        %300 = vmatprep.subr.mxu0 0.0
        %301 = vmatpush2.msra.mxu0 0.0
        %302 = vmatprep.subr.mxu0 0.0
        %303 = vmatpush2.msra.mxu0 0.0
        %304 = vmatprep.subr.mxu0 0.0
        %305 = vmatpush2.msra.mxu0 0.0
        %306 = vmatprep.mubr.f32.mxu0 0.0
        %307 = vmatmul.mubr.f32.gmra.mxu0 %v240
        %v308 = vpop.f32.mrf.mxu0
        %v309 = vadd.f32 %v231, %v308
        %v310 = vpop.f32.mrf.mxu0
        %v311 = vadd.f32 %v235, %v310
        %312 = vdwg.mxu0
        %313 = vst [vmem:[%s200] sm:$0xff] %v309
        %314 = vst [vmem:[%s200 + $0x8] sm:$0xff] %v311
        %s315 = sand.u32 %s97, 1
        %s316 = scalar_lea.sflag [#allocation4], %s315
        %s317 = sand.u32 %s97, 1
        %s318 = smul.addr %s317, 16
        %s319 = scalar_lea.vmem [#allocation7], %s318
        // Predicated region
        $region41: #{tpu_custom_call.1} parent=31 // pred_check
          %p320 = pneg %p107
        $region42: #{tpu_custom_call.1} parent=31 // pred_check_branch
          %322 = sbr.rel (%p320) target = $region44
        $region43: #{tpu_custom_call.1} parent=31 // pred_region
          %s324 = ssub.s32 256, 256
          %325 = vsyncadd %s316, %s324
          %s326 = smul.addr %s21, 2
          %s327 = smul.addr %s326, 128
          %s328 = scalar_lea.hbm %s3, %s327
          %s330 = sshll.u32 %s319, 4
          %s331 = int_to_ptr.vmem [resolvable:$true] %s330
          %333 = dma.vmem_to_hbm [thread:$0]  %s331, 256, %s328, %s316
        $region44: #{tpu_custom_call.1} parent=31 // pred_fallthru
          _
      $region32: #{tpu_custom_call.1} parent=5 // pred_fallthru
        _
      %p334 = scmp.le.s32.totalorder 2, %s16
      // Predicated region
      $region45: #{tpu_custom_call.1} parent=5 // pred_check
        %p335 = pneg %p334
      $region46: #{tpu_custom_call.1} parent=5 // pred_check_branch
        %337 = sbr.rel (%p335) target = $region48
      $region47: #{tpu_custom_call.1} parent=5 // pred_region
        %s338 = ssub.s32 %s16, 2
        // Predicated region
        $region49: #{tpu_custom_call.1} parent=47 // pred_check
          %p339 = pneg %p113
        $region50: #{tpu_custom_call.1} parent=47 // pred_check_branch
          %341 = sbr.rel (%p339) target = $region52
        $region51: #{tpu_custom_call.1} parent=47 // pred_region
          %s342 = sand.u32 %s98, 1
          %s343 = scalar_lea.sflag [#allocation4], %s342
          %s344 = sand.u32 %s98, 1
          %s345 = smul.addr %s344, 16
          %s346 = scalar_lea.vmem [#allocation7], %s345
          %347 = dma.done %s343, 256
        $region52: #{tpu_custom_call.1} parent=47 // pred_fallthru
          _
      $region48: #{tpu_custom_call.1} parent=5 // pred_fallthru
        _
    $region6: #{tpu_custom_call.1} parent=1 // loop_footer
      %s20 = sadd.s32 1, %s16
    $region7: #{tpu_custom_call.1} parent=1 // loop_footer_branch
      %15 = sbr.rel target = $region3
    $region8: #{tpu_custom_call.1} parent=1 // loop_exit
      _
    %348 = vsyncpa [#allocation3], 1
    %s349 = scalar_lea.sflag [#allocation3], 1
    %350 = vsyncpa %s349, 1
    %351 = vsyncpa [#allocation6], 1
    %352 = vsyncpa [#allocation4], 1
    %s353 = scalar_lea.sflag [#allocation4], 1
    %354 = vsyncpa %s353, 1

</llo_original>
